<compile_context>
chip_gen: v7x
topology: tpu7x:2x2x1
jax: 0.10.0
libtpu: 0.0.40
codegen_flags: <defaults>
</compile_context>

<pallas_src>
import math
import functools

import jax
import jax.numpy as jnp
from jax.experimental import pallas as pl
from jax.experimental.pallas import tpu as pltpu


def dnn_kernel(x_ref, w1_ref, b1_ref, w2_ref, b2_ref, w3_ref, b3_ref, o_ref):
    # fc1 + ReLU (accumulate in f32 on the MXU, epilogue in f32 on the VPU)
    h1 = jnp.dot(x_ref[...], w1_ref[...], preferred_element_type=jnp.float32)
    h1 = jnp.maximum(h1 + b1_ref[...], 0.0)
    # fc2 + ReLU
    h2 = jnp.dot(h1.astype(w2_ref.dtype), w2_ref[...],
                 preferred_element_type=jnp.float32)
    h2 = jnp.maximum(h2 + b2_ref[...], 0.0)
    # fc3 (logits, no activation — matches the PyTorch forward())
    h3 = jnp.dot(h2.astype(w3_ref.dtype), w3_ref[...],
                 preferred_element_type=jnp.float32)
    o_ref[...] = (h3 + b3_ref[...]).astype(o_ref.dtype)


def _round_up(v, m):
    return ((v + m - 1) // m) * m


@functools.partial(jax.jit, static_argnames=("use_bf16", "tb"))
def dnn_forward(x, params, *, use_bf16=True, tb=128):
    """Run the fused 3-layer MLP. x: (B, D_in) f32. Returns (B, out_size) f32."""
    w1, b1, w2, b2, w3, b3 = params
    B, d_in = x.shape
    h1_dim = w1.shape[1]
    h2_dim = w2.shape[1]
    out_size = w3.shape[1]

    # --- lane-dense fc3: zero-pad output features to a multiple of 128 ---------
    n_pad = max(128, _round_up(out_size, 128))
    if n_pad != out_size:
        w3p = jnp.zeros((h2_dim, n_pad), w3.dtype).at[:, :out_size].set(w3)
        b3p = jnp.zeros((1, n_pad), b3.dtype).at[:, :out_size].set(b3)
    else:
        w3p, b3p = w3, b3

    # --- matmul-input dtype (bf16 on v6e/v7x per review; biases stay f32) ------
    mm_dtype = jnp.bfloat16 if use_bf16 else jnp.float32
    xk = x.astype(mm_dtype)
    w1k = w1.astype(mm_dtype)
    w2k = w2.astype(mm_dtype)
    w3k = w3p.astype(mm_dtype)

    # --- batch tiling: TB rows per grid step, pad batch to a multiple of TB ----
    tb_eff = min(tb, max(8, _round_up(B, 8)))
    b_pad = _round_up(B, tb_eff)
    if b_pad != B:
        xk = jnp.zeros((b_pad, d_in), mm_dtype).at[:B, :].set(xk)
    grid = (b_pad // tb_eff,)

    # --- advisory cost estimate -------------------------------------------------
    flops = 2 * b_pad * (d_in * h1_dim + h1_dim * h2_dim + h2_dim * n_pad)
    bytes_accessed = (
        xk.size * xk.dtype.itemsize
        + sum(a.size * a.dtype.itemsize for a in (w1k, b1, w2k, b2, w3k, b3p))
        + b_pad * n_pad * 4
    )

    out = pl.pallas_call(
        dnn_kernel,
        out_shape=jax.ShapeDtypeStruct((b_pad, n_pad), jnp.float32),
        grid=grid,
        in_specs=[
            pl.BlockSpec((tb_eff, d_in), lambda i: (i, 0)),   # x: batch-tiled
            pl.BlockSpec(w1k.shape, lambda i: (0, 0)),        # weights/biases:
            pl.BlockSpec(b1.shape, lambda i: (0, 0)),         # VMEM-resident,
            pl.BlockSpec(w2k.shape, lambda i: (0, 0)),        # DMA'd once
            pl.BlockSpec(b2.shape, lambda i: (0, 0)),
            pl.BlockSpec(w3k.shape, lambda i: (0, 0)),
            pl.BlockSpec(b3p.shape, lambda i: (0, 0)),
        ],
        out_specs=pl.BlockSpec((tb_eff, n_pad), lambda i: (i, 0)),
        compiler_params=pltpu.CompilerParams(
            dimension_semantics=("parallel",),        # shard batch across TCs (v7x)
            vmem_limit_bytes=32 * 1024 * 1024,        # explicit; well within budget
        ),
        cost_estimate=pl.CostEstimate(
            flops=flops, transcendentals=0, bytes_accessed=bytes_accessed),
    )(xk, w1k, b1, w2k, b2, w3k, b3p)

    return out[:B, :out_size]


def init_params(key, input_size, output_size):
    """Deterministic init mimicking nn.Linear default (uniform +/- 1/sqrt(fan_in)).
    Weights stored as (in, out) so the kernel does plain x @ W + b."""
    def linear(key, fan_in, fan_out):
        kw, kb = jax.random.split(key)
        bound = 1.0 / math.sqrt(fan_in)
        w = jax.random.uniform(kw, (fan_in, fan_out), jnp.float32, -bound, bound)
        b = jax.random.uniform(kb, (1, fan_out), jnp.float32, -bound, bound)
        return w, b

    k1, k2, k3 = jax.random.split(key, 3)
    w1, b1 = linear(k1, input_size, 512)
    w2, b2 = linear(k2, 512, 128)
    w3, b3 = linear(k3, 128, output_size)
    return (w1, b1, w2, b2, w3, b3)


def dnn_reference(x, params):
    w1, b1, w2, b2, w3, b3 = params
    h = jnp.maximum(x @ w1 + b1, 0.0)
    h = jnp.maximum(h @ w2 + b2, 0.0)
    return h @ w3 + b3


if __name__ == "__main__":
    input_size = 32
    output_size = 10

    key = jax.random.PRNGKey(0)
    kx, kp, kx2 = jax.random.split(key, 3)
    params = init_params(kp, input_size, output_size)

    # Small batch (single grid step, exercises tiny-B path).
    x_small = jax.random.normal(kx, (8, input_size), jnp.float32)
    # Larger, non-multiple-of-tile batch (exercises grid + batch padding).
    x_big = jax.random.normal(kx2, (200, input_size), jnp.float32)

    # 1) Exact f32 path vs. f32 reference (tight tolerance).
    out_f32 = dnn_forward(x_small, params, use_bf16=False)
    jax.block_until_ready(out_f32)
    ref_small = dnn_reference(x_small, params)
    assert out_f32.shape == (8, output_size)
    assert jnp.allclose(out_f32, ref_small, atol=1e-4, rtol=1e-4), "f32 mismatch"

    # 2) bf16 matmul-input path (perf default) vs. f32 reference (bf16 tolerance).
    out_bf16 = dnn_forward(x_big, params, use_bf16=True)
    jax.block_until_ready(out_bf16)
    ref_big = dnn_reference(x_big, params)
    assert out_bf16.shape == (200, output_size)
    assert jnp.allclose(out_bf16, ref_big, atol=5e-2, rtol=5e-2), "bf16 mismatch"

    print("KERNEL_OK")
</pallas_src>

<mosaic_0001>
module attributes {stable_mosaic.version = 11 : i64} {
  func.func @dnn_kernel(%arg0: i32, %arg1: memref<8x32xf32, #tpu.memory_space<vmem>>, %arg2: memref<32x512xf32, #tpu.memory_space<vmem>>, %arg3: memref<1x512xf32, #tpu.memory_space<vmem>>, %arg4: memref<512x128xf32, #tpu.memory_space<vmem>>, %arg5: memref<1x128xf32, #tpu.memory_space<vmem>>, %arg6: memref<128x128xf32, #tpu.memory_space<vmem>>, %arg7: memref<1x128xf32, #tpu.memory_space<vmem>>, %arg8: memref<8x128xf32, #tpu.memory_space<vmem>>) attributes {dimension_semantics = [#tpu.dimension_semantics<parallel>], iteration_bounds = array<i64: 1>, scalar_prefetch = 0 : i64, scratch_operands = 0 : i64, tpu.core_type = #tpu.core_type<tc>, window_params = [{transform_indices = @transform_0, window_bounds = array<i64: 8, 32>}, {pipeline_mode = #tpu.pipeline_mode<synchronous>, transform_indices = @transform_1, window_bounds = array<i64: 32, 512>}, {pipeline_mode = #tpu.pipeline_mode<synchronous>, transform_indices = @transform_2, window_bounds = array<i64: 1, 512>}, {pipeline_mode = #tpu.pipeline_mode<synchronous>, transform_indices = @transform_3, window_bounds = array<i64: 512, 128>}, {pipeline_mode = #tpu.pipeline_mode<synchronous>, transform_indices = @transform_4, window_bounds = array<i64: 1, 128>}, {pipeline_mode = #tpu.pipeline_mode<synchronous>, transform_indices = @transform_5, window_bounds = array<i64: 128, 128>}, {pipeline_mode = #tpu.pipeline_mode<synchronous>, transform_indices = @transform_6, window_bounds = array<i64: 1, 128>}, {transform_indices = @transform_7, window_bounds = array<i64: 8, 128>}]} {
    %c0 = arith.constant 0 : index
    %c0_0 = arith.constant 0 : index
    %0 = vector.load %arg1[%c0, %c0_0] : memref<8x32xf32, #tpu.memory_space<vmem>>, vector<8x32xf32>
    %c0_1 = arith.constant 0 : index
    %c0_2 = arith.constant 0 : index
    %1 = vector.load %arg2[%c0_1, %c0_2] : memref<32x512xf32, #tpu.memory_space<vmem>>, vector<32x512xf32>
    %cst = arith.constant dense<0.000000e+00> : vector<8x512xf32>
    %2 = tpu.matmul %0, %1, %cst {dimension_numbers = #tpu.dot_dimension_numbers<[1], [0], [0], [1], [0, 0, 1, 1], [], []>} : vector<8x32xf32>, vector<32x512xf32>, vector<8x512xf32> -> vector<8x512xf32>
    %c0_3 = arith.constant 0 : index
    %c0_4 = arith.constant 0 : index
    %3 = vector.load %arg3[%c0_3, %c0_4] : memref<1x512xf32, #tpu.memory_space<vmem>>, vector<1x512xf32>
    %4 = vector.broadcast %3 : vector<1x512xf32> to vector<8x512xf32>
    %5 = arith.addf %2, %4 : vector<8x512xf32>
    %cst_5 = arith.constant 0.000000e+00 : f32
    %6 = vector.broadcast %cst_5 : f32 to vector<8x512xf32>
    %7 = arith.maximumf %5, %6 : vector<8x512xf32>
    %c0_6 = arith.constant 0 : index
    %c0_7 = arith.constant 0 : index
    %8 = vector.load %arg4[%c0_6, %c0_7] : memref<512x128xf32, #tpu.memory_space<vmem>>, vector<512x128xf32>
    %cst_8 = arith.constant dense<0.000000e+00> : vector<8x128xf32>
    %9 = tpu.matmul %7, %8, %cst_8 {dimension_numbers = #tpu.dot_dimension_numbers<[1], [0], [0], [1], [0, 0, 1, 1], [], []>} : vector<8x512xf32>, vector<512x128xf32>, vector<8x128xf32> -> vector<8x128xf32>
    %c0_9 = arith.constant 0 : index
    %c0_10 = arith.constant 0 : index
    %10 = vector.load %arg5[%c0_9, %c0_10] : memref<1x128xf32, #tpu.memory_space<vmem>>, vector<1x128xf32>
    %11 = vector.broadcast %10 : vector<1x128xf32> to vector<8x128xf32>
    %12 = arith.addf %9, %11 : vector<8x128xf32>
    %cst_11 = arith.constant 0.000000e+00 : f32
    %13 = vector.broadcast %cst_11 : f32 to vector<8x128xf32>
    %14 = arith.maximumf %12, %13 : vector<8x128xf32>
    %c0_12 = arith.constant 0 : index
    %c0_13 = arith.constant 0 : index
    %15 = vector.load %arg6[%c0_12, %c0_13] : memref<128x128xf32, #tpu.memory_space<vmem>>, vector<128x128xf32>
    %cst_14 = arith.constant dense<0.000000e+00> : vector<8x128xf32>
    %16 = tpu.matmul %14, %15, %cst_14 {dimension_numbers = #tpu.dot_dimension_numbers<[1], [0], [0], [1], [0, 0, 1, 1], [], []>} : vector<8x128xf32>, vector<128x128xf32>, vector<8x128xf32> -> vector<8x128xf32>
    %c0_15 = arith.constant 0 : index
    %c0_16 = arith.constant 0 : index
    %17 = vector.load %arg7[%c0_15, %c0_16] : memref<1x128xf32, #tpu.memory_space<vmem>>, vector<1x128xf32>
    %18 = vector.broadcast %17 : vector<1x128xf32> to vector<8x128xf32>
    %19 = arith.addf %16, %18 : vector<8x128xf32>
    %c0_17 = arith.constant 0 : index
    %c0_18 = arith.constant 0 : index
    %20 = vector.load %arg8[%c0_17, %c0_18] : memref<8x128xf32, #tpu.memory_space<vmem>>, vector<8x128xf32>
    tpu.vector_store %arg8[%c0_17, %c0_18], %19 {strides = array<i32>} : memref<8x128xf32, #tpu.memory_space<vmem>>, vector<8x128xf32>,
    return
  }
  func.func @transform_0(%arg0: i32) -> (i32, i32) {
    %c0_i32 = arith.constant 0 : i32
    %c0_i32_0 = arith.constant 0 : i32
    return %arg0, %c0_i32 : i32, i32
  }
  func.func @transform_1(%arg0: i32) -> (i32, i32) {
    %c0_i32 = arith.constant 0 : i32
    %c0_i32_0 = arith.constant 0 : i32
    %c0_i32_1 = arith.constant 0 : i32
    return %c0_i32, %c0_i32_0 : i32, i32
  }
  func.func @transform_2(%arg0: i32) -> (i32, i32) {
    %c0_i32 = arith.constant 0 : i32
    %c0_i32_0 = arith.constant 0 : i32
    %c0_i32_1 = arith.constant 0 : i32
    return %c0_i32, %c0_i32_0 : i32, i32
  }
  func.func @transform_3(%arg0: i32) -> (i32, i32) {
    %c0_i32 = arith.constant 0 : i32
    %c0_i32_0 = arith.constant 0 : i32
    %c0_i32_1 = arith.constant 0 : i32
    return %c0_i32, %c0_i32_0 : i32, i32
  }
  func.func @transform_4(%arg0: i32) -> (i32, i32) {
    %c0_i32 = arith.constant 0 : i32
    %c0_i32_0 = arith.constant 0 : i32
    %c0_i32_1 = arith.constant 0 : i32
    return %c0_i32, %c0_i32_0 : i32, i32
  }
  func.func @transform_5(%arg0: i32) -> (i32, i32) {
    %c0_i32 = arith.constant 0 : i32
    %c0_i32_0 = arith.constant 0 : i32
    %c0_i32_1 = arith.constant 0 : i32
    return %c0_i32, %c0_i32_0 : i32, i32
  }
  func.func @transform_6(%arg0: i32) -> (i32, i32) {
    %c0_i32 = arith.constant 0 : i32
    %c0_i32_0 = arith.constant 0 : i32
    %c0_i32_1 = arith.constant 0 : i32
    return %c0_i32, %c0_i32_0 : i32, i32
  }
  func.func @transform_7(%arg0: i32) -> (i32, i32) {
    %c0_i32 = arith.constant 0 : i32
    %c0_i32_0 = arith.constant 0 : i32
    return %arg0, %c0_i32 : i32, i32
  }
}

</mosaic_0001>

<llo_original>
// kernel: dnn_forward.1
$region0: #{dnn_forward.1}
  #allocation0 [shape = 'u32[]', space=smem, size = 0x4, offset = 0x4, fixed_abs, tag = 'smem constant byte address 0x4 - core index']
  #allocation1 [shape = 'u32[144,128]{1,0:T(1,128)}', space=vmem, size = 0x12000, scoped, tag = 'internal scratch']
  %s0 = inlined_call_operand.vmem [shape: f32[8,32], index: 0, kind: input, shape index: {}]
  %s1 = inlined_call_operand.vmem [shape: f32[32,512], index: 1, kind: input, shape index: {}]
  %s2 = inlined_call_operand.vmem [shape: f32[1,512], index: 2, kind: input, shape index: {}]
  %s3 = inlined_call_operand.vmem [shape: f32[512,128], index: 3, kind: input, shape index: {}]
  %s4 = inlined_call_operand.vmem [shape: f32[1,128], index: 4, kind: input, shape index: {}]
  %s5 = inlined_call_operand.vmem [shape: f32[128,128], index: 5, kind: input, shape index: {}]
  %s6 = inlined_call_operand.vmem [shape: f32[1,128], index: 6, kind: input, shape index: {}]
  %s7 = inlined_call_operand.hbm [shape: f32[8,128], index: 7, kind: output, shape index: {}]
  %s8 = sld [smem:[#allocation0]]
  $region38: #{dnn_forward.1} parent=0
    _
  %s10 = ssub.s32 1, %s8
  %s11 = scalar_select 0, %s10, %s8
  $region1: #{dnn_forward.1} parent=0
    #allocation2 [shape = 'u8[4096]{0}', space=vmem, size = 0x1000, scoped, tag = 'output window, operand 0, single buffered']
    #allocation3 [shape = 's32[1]{0}', space=sflag, size = 0x4, scoped, tag = 'scoped memory for dnn_forward.1']
    %12 = vsyncpa [#allocation3], 0
    // Predicated region
    $region2: #{dnn_forward.1} parent=1 // pred_check
      _
    $region3: #{dnn_forward.1} parent=1 // pred_check_branch
      %14 = sbr.rel (0) target = $region5
    $region4: #{dnn_forward.1} parent=1 // pred_region
      _
    $region5: #{dnn_forward.1} parent=1 // pred_fallthru
      _
    // Predicated region
    $region6: #{dnn_forward.1} parent=1 // pred_check
      _
    $region7: #{dnn_forward.1} parent=1 // pred_check_branch
      %16 = sbr.rel (0) target = $region9
    $region8: #{dnn_forward.1} parent=1 // pred_region
      _
    $region9: #{dnn_forward.1} parent=1 // pred_fallthru
      _
    // Predicated region
    $region10: #{dnn_forward.1} parent=1 // pred_check
      _
    $region11: #{dnn_forward.1} parent=1 // pred_check_branch
      %18 = sbr.rel (0) target = $region13
    $region12: #{dnn_forward.1} parent=1 // pred_region
      _
    $region13: #{dnn_forward.1} parent=1 // pred_fallthru
      _
    // Predicated region
    $region14: #{dnn_forward.1} parent=1 // pred_check
      _
    $region15: #{dnn_forward.1} parent=1 // pred_check_branch
      %20 = sbr.rel (0) target = $region17
    $region16: #{dnn_forward.1} parent=1 // pred_region
      _
    $region17: #{dnn_forward.1} parent=1 // pred_fallthru
      _
    // Predicated region
    $region18: #{dnn_forward.1} parent=1 // pred_check
      _
    $region19: #{dnn_forward.1} parent=1 // pred_check_branch
      %22 = sbr.rel (0) target = $region21
    $region20: #{dnn_forward.1} parent=1 // pred_region
      _
    $region21: #{dnn_forward.1} parent=1 // pred_fallthru
      _
    // Predicated region
    $region22: #{dnn_forward.1} parent=1 // pred_check
      _
    $region23: #{dnn_forward.1} parent=1 // pred_check_branch
      %24 = sbr.rel (0) target = $region25
    $region24: #{dnn_forward.1} parent=1 // pred_region
      _
    $region25: #{dnn_forward.1} parent=1 // pred_fallthru
      _
    // Predicated region
    $region26: #{dnn_forward.1} parent=1 // pred_check
      _
    $region27: #{dnn_forward.1} parent=1 // pred_check_branch
      %26 = sbr.rel (0) target = $region29
    $region28: #{dnn_forward.1} parent=1 // pred_region
      _
    $region29: #{dnn_forward.1} parent=1 // pred_fallthru
      _
    %v27 = vld [vmem:[%s0] sm:$0xff]
    %v28 = vld [vmem:[%s1] sm:$0xff]
    %v29 = vld [vmem:[%s1 + $0x8] sm:$0xff]
    %v30 = vld [vmem:[%s1 + $0x10] sm:$0xff]
    %v31 = vld [vmem:[%s1 + $0x18] sm:$0xff]
    %v32 = vld [vmem:[%s1 + $0x20] sm:$0xff]
    %v33 = vld [vmem:[%s1 + $0x28] sm:$0xff]
    %v34 = vld [vmem:[%s1 + $0x30] sm:$0xff]
    %v35 = vld [vmem:[%s1 + $0x38] sm:$0xff]
    %v36 = vld [vmem:[%s1 + $0x40] sm:$0xff]
    %v37 = vld [vmem:[%s1 + $0x48] sm:$0xff]
    %v38 = vld [vmem:[%s1 + $0x50] sm:$0xff]
    %v39 = vld [vmem:[%s1 + $0x58] sm:$0xff]
    %v40 = vld [vmem:[%s1 + $0x60] sm:$0xff]
    %v41 = vld [vmem:[%s1 + $0x68] sm:$0xff]
    %v42 = vld [vmem:[%s1 + $0x70] sm:$0xff]
    %v43 = vld [vmem:[%s1 + $0x78] sm:$0xff]
    %v44 = vld [vmem:[%s2] sm:$0xf]
    %v46 = vlaneseq
    %v47 = vshrl.u32 %v46, 7
    %v48 = vsub.s32 0, %v47
    %v49 = vrot.slane %v44, %v48
    %v50 = vlaneseq
    %v51 = vshrl.u32 %v50, 7
    %v52 = vsub.s32 1, %v51
    %v53 = vrot.slane %v44, %v52
    %v54 = vlaneseq
    %v55 = vshrl.u32 %v54, 7
    %v56 = vsub.s32 2, %v55
    %v57 = vrot.slane %v44, %v56
    %v58 = vlaneseq
    %v59 = vshrl.u32 %v58, 7
    %v60 = vsub.s32 3, %v59
    %v61 = vrot.slane %v44, %v60
    %vm66 = vcmask 261120
    %v68 = vsel %vm66, %v27, 0
    %70 = vmatprep.subr.mxu0 %v29
    %71 = vmatpush1.msra.mxu0 %v28
    %72 = vmatprep.subr.mxu0 %v33
    %73 = vmatpush1.msra.mxu0 %v32
    %74 = vmatprep.subr.mxu0 %v37
    %75 = vmatpush1.msra.mxu0 %v36
    %76 = vmatprep.subr.mxu0 %v41
    %77 = vmatpush1.msra.mxu0 %v40
    %78 = vmatprep.subr.mxu0 0.0
    %79 = vmatpush1.msra.mxu0 0.0
    %80 = vmatprep.subr.mxu0 0.0
    %81 = vmatpush1.msra.mxu0 0.0
    %82 = vmatprep.subr.mxu0 0.0
    %83 = vmatpush1.msra.mxu0 0.0
    %84 = vmatprep.subr.mxu0 0.0
    %85 = vmatpush1.msra.mxu0 0.0
    %86 = vmatprep.subr.mxu0 0.0
    %87 = vmatpush1.msra.mxu0 0.0
    %88 = vmatprep.subr.mxu0 0.0
    %89 = vmatpush1.msra.mxu0 0.0
    %90 = vmatprep.subr.mxu0 0.0
    %91 = vmatpush1.msra.mxu0 0.0
    %92 = vmatprep.subr.mxu0 0.0
    %93 = vmatpush1.msra.mxu0 0.0
    %94 = vmatprep.subr.mxu0 0.0
    %95 = vmatpush1.msra.mxu0 0.0
    %96 = vmatprep.subr.mxu0 0.0
    %97 = vmatpush1.msra.mxu0 0.0
    %98 = vmatprep.subr.mxu0 0.0
    %99 = vmatpush1.msra.mxu0 0.0
    %100 = vmatprep.subr.mxu0 0.0
    %101 = vmatpush1.msra.mxu0 0.0
    %102 = vmatprep.subr.mxu0 0.0
    %103 = vmatpush1.msra.mxu0 0.0
    %104 = vmatprep.subr.mxu0 0.0
    %105 = vmatpush1.msra.mxu0 0.0
    %106 = vmatprep.subr.mxu0 0.0
    %107 = vmatpush1.msra.mxu0 0.0
    %108 = vmatprep.subr.mxu0 0.0
    %109 = vmatpush1.msra.mxu0 0.0
    %110 = vmatprep.subr.mxu0 0.0
    %111 = vmatpush1.msra.mxu0 0.0
    %112 = vmatprep.subr.mxu0 0.0
    %113 = vmatpush1.msra.mxu0 0.0
    %114 = vmatprep.subr.mxu0 0.0
    %115 = vmatpush1.msra.mxu0 0.0
    %116 = vmatprep.subr.mxu0 0.0
    %117 = vmatpush1.msra.mxu0 0.0
    %118 = vmatprep.subr.mxu0 0.0
    %119 = vmatpush1.msra.mxu0 0.0
    %120 = vmatprep.subr.mxu0 0.0
    %121 = vmatpush1.msra.mxu0 0.0
    %122 = vmatprep.subr.mxu0 0.0
    %123 = vmatpush1.msra.mxu0 0.0
    %124 = vmatprep.subr.mxu0 0.0
    %125 = vmatpush1.msra.mxu0 0.0
    %126 = vmatprep.subr.mxu0 0.0
    %127 = vmatpush1.msra.mxu0 0.0
    %128 = vmatprep.subr.mxu0 0.0
    %129 = vmatpush1.msra.mxu0 0.0
    %130 = vmatprep.subr.mxu0 0.0
    %131 = vmatpush1.msra.mxu0 0.0
    %132 = vmatprep.subr.mxu0 0.0
    %133 = vmatpush1.msra.mxu0 0.0
    %134 = vmatprep.mubr.f32.mxu0 0.0
    %135 = vmatmul.mubr.f32.gmra.mrb[0].mxu0 %v68
    %v136 = vpop.f32.mrb[0].mxu0
    %v137 = vadd.f32 %v49, %v136
    %v138 = vpop.f32.mrb[0].mxu0
    %v139 = vadd.f32 %v53, %v138
    %140 = vdwg.mxu0
    %141 = vmatprep.subr.mxu0 %v31
    %142 = vmatpush1.msra.mxu0 %v30
    %143 = vmatprep.subr.mxu0 %v35
    %144 = vmatpush1.msra.mxu0 %v34
    %145 = vmatprep.subr.mxu0 %v39
    %146 = vmatpush1.msra.mxu0 %v38
    %147 = vmatprep.subr.mxu0 %v43
    %148 = vmatpush1.msra.mxu0 %v42
    %149 = vmatprep.subr.mxu0 0.0
    %150 = vmatpush1.msra.mxu0 0.0
    %151 = vmatprep.subr.mxu0 0.0
    %152 = vmatpush1.msra.mxu0 0.0
    %153 = vmatprep.subr.mxu0 0.0
    %154 = vmatpush1.msra.mxu0 0.0
    %155 = vmatprep.subr.mxu0 0.0
    %156 = vmatpush1.msra.mxu0 0.0
    %157 = vmatprep.subr.mxu0 0.0
    %158 = vmatpush1.msra.mxu0 0.0
    %159 = vmatprep.subr.mxu0 0.0
    %160 = vmatpush1.msra.mxu0 0.0
    %161 = vmatprep.subr.mxu0 0.0
    %162 = vmatpush1.msra.mxu0 0.0
    %163 = vmatprep.subr.mxu0 0.0
    %164 = vmatpush1.msra.mxu0 0.0
    %165 = vmatprep.subr.mxu0 0.0
    %166 = vmatpush1.msra.mxu0 0.0
    %167 = vmatprep.subr.mxu0 0.0
    %168 = vmatpush1.msra.mxu0 0.0
    %169 = vmatprep.subr.mxu0 0.0
    %170 = vmatpush1.msra.mxu0 0.0
    %171 = vmatprep.subr.mxu0 0.0
    %172 = vmatpush1.msra.mxu0 0.0
    %173 = vmatprep.subr.mxu0 0.0
    %174 = vmatpush1.msra.mxu0 0.0
    %175 = vmatprep.subr.mxu0 0.0
    %176 = vmatpush1.msra.mxu0 0.0
    %177 = vmatprep.subr.mxu0 0.0
    %178 = vmatpush1.msra.mxu0 0.0
    %179 = vmatprep.subr.mxu0 0.0
    %180 = vmatpush1.msra.mxu0 0.0
    %181 = vmatprep.subr.mxu0 0.0
    %182 = vmatpush1.msra.mxu0 0.0
    %183 = vmatprep.subr.mxu0 0.0
    %184 = vmatpush1.msra.mxu0 0.0
    %185 = vmatprep.subr.mxu0 0.0
    %186 = vmatpush1.msra.mxu0 0.0
    %187 = vmatprep.subr.mxu0 0.0
    %188 = vmatpush1.msra.mxu0 0.0
    %189 = vmatprep.subr.mxu0 0.0
    %190 = vmatpush1.msra.mxu0 0.0
    %191 = vmatprep.subr.mxu0 0.0
    %192 = vmatpush1.msra.mxu0 0.0
    %193 = vmatprep.subr.mxu0 0.0
    %194 = vmatpush1.msra.mxu0 0.0
    %195 = vmatprep.subr.mxu0 0.0
    %196 = vmatpush1.msra.mxu0 0.0
    %197 = vmatprep.subr.mxu0 0.0
    %198 = vmatpush1.msra.mxu0 0.0
    %199 = vmatprep.subr.mxu0 0.0
    %200 = vmatpush1.msra.mxu0 0.0
    %201 = vmatprep.subr.mxu0 0.0
    %202 = vmatpush1.msra.mxu0 0.0
    %203 = vmatprep.subr.mxu0 0.0
    %204 = vmatpush1.msra.mxu0 0.0
    %205 = vmatprep.mubr.f32.mxu0 0.0
    %206 = vmatmul.mubr.f32.gmra.mrb[0].mxu0 %v68
    %v207 = vpop.f32.mrb[0].mxu0
    %v208 = vadd.f32 %v57, %v207
    %v209 = vpop.f32.mrb[0].mxu0
    %v210 = vadd.f32 %v61, %v209
    %211 = vdwg.mxu0
    %v212 = vmax.f32 %v137, 0.0
    %v213 = vmax.f32 %v139, 0.0
    %v214 = vmax.f32 %v208, 0.0
    %v215 = vmax.f32 %v210, 0.0
    %v216 = vld [vmem:[%s3] sm:$0xff]
    %v217 = vld [vmem:[%s3 + $0x8] sm:$0xff]
    %v218 = vld [vmem:[%s3 + $0x10] sm:$0xff]
    %v219 = vld [vmem:[%s3 + $0x18] sm:$0xff]
    %v220 = vld [vmem:[%s3 + $0x20] sm:$0xff]
    %v221 = vld [vmem:[%s3 + $0x28] sm:$0xff]
    %v222 = vld [vmem:[%s3 + $0x30] sm:$0xff]
    %v223 = vld [vmem:[%s3 + $0x38] sm:$0xff]
    %v224 = vld [vmem:[%s3 + $0x40] sm:$0xff]
    %v225 = vld [vmem:[%s3 + $0x48] sm:$0xff]
    %v226 = vld [vmem:[%s3 + $0x50] sm:$0xff]
    %v227 = vld [vmem:[%s3 + $0x58] sm:$0xff]
    %v228 = vld [vmem:[%s3 + $0x60] sm:$0xff]
    %v229 = vld [vmem:[%s3 + $0x68] sm:$0xff]
    %v230 = vld [vmem:[%s3 + $0x70] sm:$0xff]
    %v231 = vld [vmem:[%s3 + $0x78] sm:$0xff]
    %v232 = vld [vmem:[%s3 + $0x80] sm:$0xff]
    %v233 = vld [vmem:[%s3 + $0x88] sm:$0xff]
    %v234 = vld [vmem:[%s3 + $0x90] sm:$0xff]
    %v235 = vld [vmem:[%s3 + $0x98] sm:$0xff]
    %v236 = vld [vmem:[%s3 + $0xa0] sm:$0xff]
    %v237 = vld [vmem:[%s3 + $0xa8] sm:$0xff]
    %v238 = vld [vmem:[%s3 + $0xb0] sm:$0xff]
    %v239 = vld [vmem:[%s3 + $0xb8] sm:$0xff]
    %v240 = vld [vmem:[%s3 + $0xc0] sm:$0xff]
    %v241 = vld [vmem:[%s3 + $0xc8] sm:$0xff]
    %v242 = vld [vmem:[%s3 + $0xd0] sm:$0xff]
    %v243 = vld [vmem:[%s3 + $0xd8] sm:$0xff]
    %v244 = vld [vmem:[%s3 + $0xe0] sm:$0xff]
    %v245 = vld [vmem:[%s3 + $0xe8] sm:$0xff]
    %v246 = vld [vmem:[%s3 + $0xf0] sm:$0xff]
    %v247 = vld [vmem:[%s3 + $0xf8] sm:$0xff]
    %v248 = vld [vmem:[%s3 + $0x100] sm:$0xff]
    %v249 = vld [vmem:[%s3 + $0x108] sm:$0xff]
    %v250 = vld [vmem:[%s3 + $0x110] sm:$0xff]
    %v251 = vld [vmem:[%s3 + $0x118] sm:$0xff]
    %v252 = vld [vmem:[%s3 + $0x120] sm:$0xff]
    %v253 = vld [vmem:[%s3 + $0x128] sm:$0xff]
    %v254 = vld [vmem:[%s3 + $0x130] sm:$0xff]
    %v255 = vld [vmem:[%s3 + $0x138] sm:$0xff]
    %v256 = vld [vmem:[%s3 + $0x140] sm:$0xff]
    %v257 = vld [vmem:[%s3 + $0x148] sm:$0xff]
    %v258 = vld [vmem:[%s3 + $0x150] sm:$0xff]
    %v259 = vld [vmem:[%s3 + $0x158] sm:$0xff]
    %v260 = vld [vmem:[%s3 + $0x160] sm:$0xff]
    %v261 = vld [vmem:[%s3 + $0x168] sm:$0xff]
    %v262 = vld [vmem:[%s3 + $0x170] sm:$0xff]
    %v263 = vld [vmem:[%s3 + $0x178] sm:$0xff]
    %v264 = vld [vmem:[%s3 + $0x180] sm:$0xff]
    %v265 = vld [vmem:[%s3 + $0x188] sm:$0xff]
    %v266 = vld [vmem:[%s3 + $0x190] sm:$0xff]
    %v267 = vld [vmem:[%s3 + $0x198] sm:$0xff]
    %v268 = vld [vmem:[%s3 + $0x1a0] sm:$0xff]
    %v269 = vld [vmem:[%s3 + $0x1a8] sm:$0xff]
    %v270 = vld [vmem:[%s3 + $0x1b0] sm:$0xff]
    %v271 = vld [vmem:[%s3 + $0x1b8] sm:$0xff]
    %v272 = vld [vmem:[%s3 + $0x1c0] sm:$0xff]
    %v273 = vld [vmem:[%s3 + $0x1c8] sm:$0xff]
    %v274 = vld [vmem:[%s3 + $0x1d0] sm:$0xff]
    %v275 = vld [vmem:[%s3 + $0x1d8] sm:$0xff]
    %v276 = vld [vmem:[%s3 + $0x1e0] sm:$0xff]
    %v277 = vld [vmem:[%s3 + $0x1e8] sm:$0xff]
    %v278 = vld [vmem:[%s3 + $0x1f0] sm:$0xff]
    %v279 = vld [vmem:[%s3 + $0x1f8] sm:$0xff]
    %v280 = vld [vmem:[%s4] sm:$0x1]
    %v282 = vlaneseq
    %v283 = vshrl.u32 %v282, 7
    %v284 = vsub.s32 0, %v283
    %v285 = vrot.slane %v280, %v284
    %287 = vmatprep.subr.mxu0 0.0
    %288 = vmatpush1.msra.mxu0 %v216
    %289 = vmatprep.subr.mxu0 0.0
    %290 = vmatpush1.msra.mxu0 %v217
    %291 = vmatprep.subr.mxu0 0.0
    %292 = vmatpush1.msra.mxu0 %v218
    %293 = vmatprep.subr.mxu0 0.0
    %294 = vmatpush1.msra.mxu0 %v219
    %295 = vmatprep.subr.mxu0 0.0
    %296 = vmatpush1.msra.mxu0 %v220
    %297 = vmatprep.subr.mxu0 0.0
    %298 = vmatpush1.msra.mxu0 %v221
    %299 = vmatprep.subr.mxu0 0.0
    %300 = vmatpush1.msra.mxu0 %v222
    %301 = vmatprep.subr.mxu0 0.0
    %302 = vmatpush1.msra.mxu0 %v223
    %303 = vmatprep.subr.mxu0 0.0
    %304 = vmatpush1.msra.mxu0 %v224
    %305 = vmatprep.subr.mxu0 0.0
    %306 = vmatpush1.msra.mxu0 %v225
    %307 = vmatprep.subr.mxu0 0.0
    %308 = vmatpush1.msra.mxu0 %v226
    %309 = vmatprep.subr.mxu0 0.0
    %310 = vmatpush1.msra.mxu0 %v227
    %311 = vmatprep.subr.mxu0 0.0
    %312 = vmatpush1.msra.mxu0 %v228
    %313 = vmatprep.subr.mxu0 0.0
    %314 = vmatpush1.msra.mxu0 %v229
    %315 = vmatprep.subr.mxu0 0.0
    %316 = vmatpush1.msra.mxu0 %v230
    %317 = vmatprep.subr.mxu0 0.0
    %318 = vmatpush1.msra.mxu0 %v231
    %319 = vmatprep.subr.mxu0 0.0
    %320 = vmatpush1.msra.mxu0 %v232
    %321 = vmatprep.subr.mxu0 0.0
    %322 = vmatpush1.msra.mxu0 %v233
    %323 = vmatprep.subr.mxu0 0.0
    %324 = vmatpush1.msra.mxu0 %v234
    %325 = vmatprep.subr.mxu0 0.0
    %326 = vmatpush1.msra.mxu0 %v235
    %327 = vmatprep.subr.mxu0 0.0
    %328 = vmatpush1.msra.mxu0 %v236
    %329 = vmatprep.subr.mxu0 0.0
    %330 = vmatpush1.msra.mxu0 %v237
    %331 = vmatprep.subr.mxu0 0.0
    %332 = vmatpush1.msra.mxu0 %v238
    %333 = vmatprep.subr.mxu0 0.0
    %334 = vmatpush1.msra.mxu0 %v239
    %335 = vmatprep.subr.mxu0 0.0
    %336 = vmatpush1.msra.mxu0 %v240
    %337 = vmatprep.subr.mxu0 0.0
    %338 = vmatpush1.msra.mxu0 %v241
    %339 = vmatprep.subr.mxu0 0.0
    %340 = vmatpush1.msra.mxu0 %v242
    %341 = vmatprep.subr.mxu0 0.0
    %342 = vmatpush1.msra.mxu0 %v243
    %343 = vmatprep.subr.mxu0 0.0
    %344 = vmatpush1.msra.mxu0 %v244
    %345 = vmatprep.subr.mxu0 0.0
    %346 = vmatpush1.msra.mxu0 %v245
    %347 = vmatprep.subr.mxu0 0.0
    %348 = vmatpush1.msra.mxu0 %v246
    %349 = vmatprep.subr.mxu0 0.0
    %350 = vmatpush1.msra.mxu0 %v247
    %351 = vmatprep.mubr.f32.mxu0 %v213
    %352 = vmatmul.mubr.f32.gmra.mrb[0].mxu0 %v212
    %v353 = vpop.f32.mrb[0].mxu0
    %v354 = vadd.f32 %v285, %v353
    %v355 = vpop.f32.mrb[0].mxu0
    %356 = vdwg.mxu0
    %357 = vmatprep.subr.mxu0 0.0
    %358 = vmatpush1.msra.mxu0 %v248
    %359 = vmatprep.subr.mxu0 0.0
    %360 = vmatpush1.msra.mxu0 %v249
    %361 = vmatprep.subr.mxu0 0.0
    %362 = vmatpush1.msra.mxu0 %v250
    %363 = vmatprep.subr.mxu0 0.0
    %364 = vmatpush1.msra.mxu0 %v251
    %365 = vmatprep.subr.mxu0 0.0
    %366 = vmatpush1.msra.mxu0 %v252
    %367 = vmatprep.subr.mxu0 0.0
    %368 = vmatpush1.msra.mxu0 %v253
    %369 = vmatprep.subr.mxu0 0.0
    %370 = vmatpush1.msra.mxu0 %v254
    %371 = vmatprep.subr.mxu0 0.0
    %372 = vmatpush1.msra.mxu0 %v255
    %373 = vmatprep.subr.mxu0 0.0
    %374 = vmatpush1.msra.mxu0 %v256
    %375 = vmatprep.subr.mxu0 0.0
    %376 = vmatpush1.msra.mxu0 %v257
    %377 = vmatprep.subr.mxu0 0.0
    %378 = vmatpush1.msra.mxu0 %v258
    %379 = vmatprep.subr.mxu0 0.0
    %380 = vmatpush1.msra.mxu0 %v259
    %381 = vmatprep.subr.mxu0 0.0
    %382 = vmatpush1.msra.mxu0 %v260
    %383 = vmatprep.subr.mxu0 0.0
    %384 = vmatpush1.msra.mxu0 %v261
    %385 = vmatprep.subr.mxu0 0.0
    %386 = vmatpush1.msra.mxu0 %v262
    %387 = vmatprep.subr.mxu0 0.0
    %388 = vmatpush1.msra.mxu0 %v263
    %389 = vmatprep.subr.mxu0 0.0
    %390 = vmatpush1.msra.mxu0 %v264
    %391 = vmatprep.subr.mxu0 0.0
    %392 = vmatpush1.msra.mxu0 %v265
    %393 = vmatprep.subr.mxu0 0.0
    %394 = vmatpush1.msra.mxu0 %v266
    %395 = vmatprep.subr.mxu0 0.0
    %396 = vmatpush1.msra.mxu0 %v267
    %397 = vmatprep.subr.mxu0 0.0
    %398 = vmatpush1.msra.mxu0 %v268
    %399 = vmatprep.subr.mxu0 0.0
    %400 = vmatpush1.msra.mxu0 %v269
    %401 = vmatprep.subr.mxu0 0.0
    %402 = vmatpush1.msra.mxu0 %v270
    %403 = vmatprep.subr.mxu0 0.0
    %404 = vmatpush1.msra.mxu0 %v271
    %405 = vmatprep.subr.mxu0 0.0
    %406 = vmatpush1.msra.mxu0 %v272
    %407 = vmatprep.subr.mxu0 0.0
    %408 = vmatpush1.msra.mxu0 %v273
    %409 = vmatprep.subr.mxu0 0.0
    %410 = vmatpush1.msra.mxu0 %v274
    %411 = vmatprep.subr.mxu0 0.0
    %412 = vmatpush1.msra.mxu0 %v275
    %413 = vmatprep.subr.mxu0 0.0
    %414 = vmatpush1.msra.mxu0 %v276
    %415 = vmatprep.subr.mxu0 0.0
    %416 = vmatpush1.msra.mxu0 %v277
    %417 = vmatprep.subr.mxu0 0.0
    %418 = vmatpush1.msra.mxu0 %v278
    %419 = vmatprep.subr.mxu0 0.0
    %420 = vmatpush1.msra.mxu0 %v279
    %421 = vmatprep.mubr.f32.mxu0 %v215
    %422 = vmatmul.mubr.f32.gmra.mrb[0].mxu0 %v214
    %v423 = vpop.f32.mrb[0].mxu0
    %v424 = vadd.f32 %v354, %v423
    %v425 = vpop.f32.mrb[0].mxu0
    %426 = vdwg.mxu0
    %v427 = vmax.f32 %v424, 0.0
    %v428 = vld [vmem:[%s5] sm:$0xff]
    %v429 = vld [vmem:[%s5 + $0x8] sm:$0xff]
    %v430 = vld [vmem:[%s5 + $0x10] sm:$0xff]
    %v431 = vld [vmem:[%s5 + $0x18] sm:$0xff]
    %v432 = vld [vmem:[%s5 + $0x20] sm:$0xff]
    %v433 = vld [vmem:[%s5 + $0x28] sm:$0xff]
    %v434 = vld [vmem:[%s5 + $0x30] sm:$0xff]
    %v435 = vld [vmem:[%s5 + $0x38] sm:$0xff]
    %v436 = vld [vmem:[%s5 + $0x40] sm:$0xff]
    %v437 = vld [vmem:[%s5 + $0x48] sm:$0xff]
    %v438 = vld [vmem:[%s5 + $0x50] sm:$0xff]
    %v439 = vld [vmem:[%s5 + $0x58] sm:$0xff]
    %v440 = vld [vmem:[%s5 + $0x60] sm:$0xff]
    %v441 = vld [vmem:[%s5 + $0x68] sm:$0xff]
    %v442 = vld [vmem:[%s5 + $0x70] sm:$0xff]
    %v443 = vld [vmem:[%s5 + $0x78] sm:$0xff]
    %v444 = vld [vmem:[%s6] sm:$0x1]
    %v446 = vlaneseq
    %v447 = vshrl.u32 %v446, 7
    %v448 = vsub.s32 0, %v447
    %v449 = vrot.slane %v444, %v448
    %451 = vmatprep.subr.mxu0 0.0
    %452 = vmatpush1.msra.mxu0 %v428
    %453 = vmatprep.subr.mxu0 0.0
    %454 = vmatpush1.msra.mxu0 %v429
    %455 = vmatprep.subr.mxu0 0.0
    %456 = vmatpush1.msra.mxu0 %v430
    %457 = vmatprep.subr.mxu0 0.0
    %458 = vmatpush1.msra.mxu0 %v431
    %459 = vmatprep.subr.mxu0 0.0
    %460 = vmatpush1.msra.mxu0 %v432
    %461 = vmatprep.subr.mxu0 0.0
    %462 = vmatpush1.msra.mxu0 %v433
    %463 = vmatprep.subr.mxu0 0.0
    %464 = vmatpush1.msra.mxu0 %v434
    %465 = vmatprep.subr.mxu0 0.0
    %466 = vmatpush1.msra.mxu0 %v435
    %467 = vmatprep.subr.mxu0 0.0
    %468 = vmatpush1.msra.mxu0 %v436
    %469 = vmatprep.subr.mxu0 0.0
    %470 = vmatpush1.msra.mxu0 %v437
    %471 = vmatprep.subr.mxu0 0.0
    %472 = vmatpush1.msra.mxu0 %v438
    %473 = vmatprep.subr.mxu0 0.0
    %474 = vmatpush1.msra.mxu0 %v439
    %475 = vmatprep.subr.mxu0 0.0
    %476 = vmatpush1.msra.mxu0 %v440
    %477 = vmatprep.subr.mxu0 0.0
    %478 = vmatpush1.msra.mxu0 %v441
    %479 = vmatprep.subr.mxu0 0.0
    %480 = vmatpush1.msra.mxu0 %v442
    %481 = vmatprep.subr.mxu0 0.0
    %482 = vmatpush1.msra.mxu0 %v443
    %483 = vmatprep.subr.mxu0 0.0
    %484 = vmatpush1.msra.mxu0 0.0
    %485 = vmatprep.subr.mxu0 0.0
    %486 = vmatpush1.msra.mxu0 0.0
    %487 = vmatprep.subr.mxu0 0.0
    %488 = vmatpush1.msra.mxu0 0.0
    %489 = vmatprep.subr.mxu0 0.0
    %490 = vmatpush1.msra.mxu0 0.0
    %491 = vmatprep.subr.mxu0 0.0
    %492 = vmatpush1.msra.mxu0 0.0
    %493 = vmatprep.subr.mxu0 0.0
    %494 = vmatpush1.msra.mxu0 0.0
    %495 = vmatprep.subr.mxu0 0.0
    %496 = vmatpush1.msra.mxu0 0.0
    %497 = vmatprep.subr.mxu0 0.0
    %498 = vmatpush1.msra.mxu0 0.0
    %499 = vmatprep.subr.mxu0 0.0
    %500 = vmatpush1.msra.mxu0 0.0
    %501 = vmatprep.subr.mxu0 0.0
    %502 = vmatpush1.msra.mxu0 0.0
    %503 = vmatprep.subr.mxu0 0.0
    %504 = vmatpush1.msra.mxu0 0.0
    %505 = vmatprep.subr.mxu0 0.0
    %506 = vmatpush1.msra.mxu0 0.0
    %507 = vmatprep.subr.mxu0 0.0
    %508 = vmatpush1.msra.mxu0 0.0
    %509 = vmatprep.subr.mxu0 0.0
    %510 = vmatpush1.msra.mxu0 0.0
    %511 = vmatprep.subr.mxu0 0.0
    %512 = vmatpush1.msra.mxu0 0.0
    %513 = vmatprep.subr.mxu0 0.0
    %514 = vmatpush1.msra.mxu0 0.0
    %515 = vmatprep.mubr.f32.mxu0 0.0
    %516 = vmatmul.mubr.f32.gmra.mrb[0].mxu0 %v427
    %v517 = vpop.f32.mrb[0].mxu0
    %v518 = vadd.f32 %v449, %v517
    %v519 = vpop.f32.mrb[0].mxu0
    %520 = vdwg.mxu0
    %521 = vst [vmem:[#allocation2] sm:$0xff] %v518
    // Predicated region
    $region30: #{dnn_forward.1} parent=1 // pred_check
      _
    $region31: #{dnn_forward.1} parent=1 // pred_check_branch
      %523 = sbr.rel (0) target = $region33
    $region32: #{dnn_forward.1} parent=1 // pred_region
      %s525 = ssub.s32 128, 128
      %526 = vsyncadd [#allocation3], %s525
      %s528 = sshll.u32 [#allocation2], 4
      %s529 = int_to_ptr.vmem [resolvable:$true] %s528
      %531 = dma.vmem_to_hbm [thread:$0]  %s529, 128, %s7, [#allocation3]
    $region33: #{dnn_forward.1} parent=1 // pred_fallthru
      _
    // Predicated region
    $region34: #{dnn_forward.1} parent=1 // pred_check
      _
    $region35: #{dnn_forward.1} parent=1 // pred_check_branch
      %533 = sbr.rel (0) target = $region37
    $region36: #{dnn_forward.1} parent=1 // pred_region
      %534 = dma.done [#allocation3], 128
    $region37: #{dnn_forward.1} parent=1 // pred_fallthru
      _
    %535 = vsyncpa [#allocation3], 1

</llo_original>
